<compile_context>
chip_gen: v7x
topology: tpu7x:2x2x1
jax: 0.10.0
libtpu: 0.0.40
codegen_flags: <defaults>
</compile_context>

<pallas_src>
import functools

import jax
import jax.numpy as jnp
from jax.experimental import pallas as pl
from jax.experimental.pallas import tpu as pltpu

LANES = 128
SUBLANES = 8


def _charbonnier_partial_kernel(x_ref, y_ref, o_ref, *, eps2):
    """One grid step: (8,128) partial sum of sqrt(diff^2 + eps^2) over its tile."""
    diff = x_ref[...].astype(jnp.float32) - y_ref[...].astype(jnp.float32)
    val = jnp.sqrt(diff * diff + jnp.float32(eps2))  # (tr, 128) f32
    tr = val.shape[0]
    # (tr, 128) -> (tr//8, 8, 128): a stack of vregs.  Summing over axis 0 is
    # pure elementwise VPU adds -- no cross-lane (XLU) work and no masked
    # (1,1) read-modify-write in the hot loop.
    partial = val.reshape(tr // SUBLANES, SUBLANES, LANES).sum(axis=0)
    o_ref[...] = partial[None]  # (1, 8, 128) per-block partial sum


def charbonnier_loss(x, y, eps=1e-3, tile_rows=1024):
    """Pallas TPU implementation of CharbonnierLoss.forward(x, y)."""
    assert x.shape == y.shape, "x and y must have the same shape"
    n = x.size
    eps = float(eps)
    eps2 = eps * eps
    tile_rows = max(SUBLANES, int(tile_rows))

    flat_x = x.reshape(-1)
    flat_y = y.reshape(-1)

    m_total = n // LANES          # number of full 128-lane rows
    lane_main = m_total * LANES   # multiple of 128

    # Row-tile size: multiple of 8 sublanes, capped by available rows.
    if m_total >= SUBLANES:
        tr = (min(tile_rows, m_total) // SUBLANES) * SUBLANES
        grid_n = m_total // tr
    else:
        tr = 0
        grid_n = 0
    rows_k = grid_n * tr          # rows covered by the kernel

    main_sum = jnp.float32(0.0)
    if rows_k > 0:
        if lane_main == n:
            # numel is a multiple of 128: reshape is a pure bitcast, no HBM copy.
            x2d = flat_x.reshape(m_total, LANES)
            y2d = flat_y.reshape(m_total, LANES)
        else:
            # Rare case (numel % 128 != 0): the prefix slice materialises a copy.
            # TODO(synk): avoid this copy with a 1D-block kernel + in-kernel tail mask.
            x2d = flat_x[:lane_main].reshape(m_total, LANES)
            y2d = flat_y[:lane_main].reshape(m_total, LANES)

        kernel = functools.partial(_charbonnier_partial_kernel, eps2=eps2)
        partials = pl.pallas_call(
            kernel,
            out_shape=jax.ShapeDtypeStruct((grid_n, SUBLANES, LANES), jnp.float32),
            grid_spec=pltpu.PrefetchScalarGridSpec(
                num_scalar_prefetch=0,
                grid=(grid_n,),
                in_specs=[
                    pl.BlockSpec((tr, LANES), lambda i: (i, 0)),
                    pl.BlockSpec((tr, LANES), lambda i: (i, 0)),
                ],
                out_specs=pl.BlockSpec((1, SUBLANES, LANES), lambda i: (i, 0, 0)),
            ),
            compiler_params=pltpu.CompilerParams(
                dimension_semantics=("parallel",),
            ),
        )(x2d, y2d)
        main_sum = jnp.sum(partials)

    # Tail (everything past the kernel-covered prefix; bounded by
    # tile_rows*128 + 127 elements) handled in plain JAX in f32.
    tail_start = rows_k * LANES
    if n - tail_start > 0:
        xt = flat_x[tail_start:].astype(jnp.float32)
        yt = flat_y[tail_start:].astype(jnp.float32)
        dt = xt - yt
        tail_sum = jnp.sum(jnp.sqrt(dt * dt + jnp.float32(eps2)))
    else:
        tail_sum = jnp.float32(0.0)

    return (main_sum + tail_sum) / jnp.float32(n)


def charbonnier_loss_ref(x, y, eps=1e-3):
    diff = x.astype(jnp.float32) - y.astype(jnp.float32)
    return jnp.mean(jnp.sqrt(diff * diff + eps * eps))


if __name__ == "__main__":
    key = jax.random.PRNGKey(0)
    kx, ky = jax.random.split(key)
    # NCHW, same as the PyTorch module would consume.
    x = jax.random.normal(kx, (2, 4, 16, 16), dtype=jnp.float32)
    y = jax.random.normal(ky, (2, 4, 16, 16), dtype=jnp.float32)

    loss = charbonnier_loss(x, y, eps=1e-3)
    loss = jax.block_until_ready(loss)

    ref = charbonnier_loss_ref(x, y, eps=1e-3)
    assert jnp.allclose(loss, ref, rtol=1e-5, atol=1e-6), (loss, ref)

    print("KERNEL_OK")
</pallas_src>

<mosaic_0001>
module attributes {stable_mosaic.version = 11 : i64} {
  func.func @_charbonnier_partial_kernel(%arg0: i32, %arg1: memref<16x128xf32, #tpu.memory_space<vmem>>, %arg2: memref<16x128xf32, #tpu.memory_space<vmem>>, %arg3: memref<1x8x128xf32, #tpu.memory_space<vmem>>) attributes {dimension_semantics = [#tpu.dimension_semantics<parallel>], iteration_bounds = array<i64: 1>, scalar_prefetch = 0 : i64, scratch_operands = 0 : i64, tpu.core_type = #tpu.core_type<tc>, window_params = [{transform_indices = @transform_0, window_bounds = array<i64: 16, 128>}, {transform_indices = @transform_1, window_bounds = array<i64: 16, 128>}, {transform_indices = @transform_2, window_bounds = array<i64: 1, 8, 128>}]} {
    %c0 = arith.constant 0 : index
    %c0_0 = arith.constant 0 : index
    %0 = vector.load %arg1[%c0, %c0_0] : memref<16x128xf32, #tpu.memory_space<vmem>>, vector<16x128xf32>
    %c0_1 = arith.constant 0 : index
    %c0_2 = arith.constant 0 : index
    %1 = vector.load %arg2[%c0_1, %c0_2] : memref<16x128xf32, #tpu.memory_space<vmem>>, vector<16x128xf32>
    %2 = arith.subf %0, %1 : vector<16x128xf32>
    %3 = arith.mulf %2, %2 : vector<16x128xf32>
    %cst = arith.constant 9.99999997E-7 : f32
    %4 = vector.broadcast %cst : f32 to vector<16x128xf32>
    %5 = arith.addf %3, %4 : vector<16x128xf32>
    %6 = math.sqrt %5 : vector<16x128xf32>
    %7 = vector.shape_cast %6 : vector<16x128xf32> to vector<2x8x128xf32>
    %cst_3 = arith.constant dense<0.000000e+00> : vector<8x128xf32>
    %8 = vector.multi_reduction <add>, %7, %cst_3 [0] : vector<2x8x128xf32> to vector<8x128xf32>
    %9 = vector.shape_cast %8 : vector<8x128xf32> to vector<1x8x128xf32>
    %c0_4 = arith.constant 0 : index
    %c0_5 = arith.constant 0 : index
    %c0_6 = arith.constant 0 : index
    %10 = vector.load %arg3[%c0_4, %c0_5, %c0_6] : memref<1x8x128xf32, #tpu.memory_space<vmem>>, vector<1x8x128xf32>
    tpu.vector_store %arg3[%c0_4, %c0_5, %c0_6], %9 {strides = array<i32>} : memref<1x8x128xf32, #tpu.memory_space<vmem>>, vector<1x8x128xf32>,
    return
  }
  func.func @transform_0(%arg0: i32) -> (i32, i32) {
    %c0_i32 = arith.constant 0 : i32
    %c0_i32_0 = arith.constant 0 : i32
    return %arg0, %c0_i32 : i32, i32
  }
  func.func @transform_1(%arg0: i32) -> (i32, i32) {
    %c0_i32 = arith.constant 0 : i32
    %c0_i32_0 = arith.constant 0 : i32
    return %arg0, %c0_i32 : i32, i32
  }
  func.func @transform_2(%arg0: i32) -> (i32, i32, i32) {
    %c0_i32 = arith.constant 0 : i32
    %c0_i32_0 = arith.constant 0 : i32
    %c0_i32_1 = arith.constant 0 : i32
    return %arg0, %c0_i32, %c0_i32_0 : i32, i32, i32
  }
}

</mosaic_0001>

<llo_original>
// kernel: tpu_custom_call.1
$region0: #{tpu_custom_call.1}
  #allocation0 [shape = 'u32[]', space=smem, size = 0x4, offset = 0x4, fixed_abs, tag = 'smem constant byte address 0x4 - core index']
  #allocation1 [shape = 'u32[144,128]{1,0:T(1,128)}', space=vmem, size = 0x12000, scoped, tag = 'internal scratch']
  %s0 = inlined_call_operand.hbm [shape: f32[16,128], index: 0, kind: input, shape index: {}]
  %s1 = inlined_call_operand.hbm [shape: f32[16,128], index: 1, kind: input, shape index: {}]
  %s2 = inlined_call_operand.hbm [shape: f32[1,8,128], index: 2, kind: output, shape index: {}]
  %s3 = sld [smem:[#allocation0]]
  $region26: #{tpu_custom_call.1} parent=0
    _
  %s5 = ssub.s32 1, %s3
  %s6 = scalar_select 0, %s5, %s3
  $region1: #{tpu_custom_call.1} parent=0
    #allocation2 [shape = 'u8[8192]{0}', space=vmem, size = 0x2000, scoped, tag = 'input window, operand 0, single buffered']
    #allocation3 [shape = 's32[1]{0}', space=sflag, size = 0x4, scoped, tag = 'scoped memory for tpu_custom_call.1']
    #allocation4 [shape = 's32[1]{0}', space=sflag, size = 0x4, scoped, tag = 'scoped memory for tpu_custom_call.1']
    #allocation5 [shape = 'u8[8192]{0}', space=vmem, size = 0x2000, scoped, tag = 'input window, operand 1, single buffered']
    #allocation6 [shape = 's32[1]{0}', space=sflag, size = 0x4, scoped, tag = 'scoped memory for tpu_custom_call.1']
    #allocation7 [shape = 'u8[4096]{0}', space=vmem, size = 0x1000, scoped, tag = 'output window, operand 0, single buffered']
    %7 = vsyncpa [#allocation3], 0
    %8 = vsyncpa [#allocation6], 0
    %9 = vsyncpa [#allocation4], 0
    // Predicated region
    $region2: #{tpu_custom_call.1} parent=1 // pred_check
      _
    $region3: #{tpu_custom_call.1} parent=1 // pred_check_branch
      %11 = sbr.rel (0) target = $region5
    $region4: #{tpu_custom_call.1} parent=1 // pred_region
      %s13 = ssub.s32 256, 256
      %14 = vsyncadd [#allocation3], %s13
      %s15 = sshll.u32 [#allocation2], 4
      %s16 = int_to_ptr.vmem [resolvable:$true] %s15
      %21 = dma.hbm_to_vmem [thread:$0]  %s0, 256, %s16, [#allocation3], 128, 128, 8
    $region5: #{tpu_custom_call.1} parent=1 // pred_fallthru
      _
    // Predicated region
    $region6: #{tpu_custom_call.1} parent=1 // pred_check
      _
    $region7: #{tpu_custom_call.1} parent=1 // pred_check_branch
      %23 = sbr.rel (0) target = $region9
    $region8: #{tpu_custom_call.1} parent=1 // pred_region
      %s25 = ssub.s32 256, 256
      %26 = vsyncadd [#allocation6], %s25
      %s27 = sshll.u32 [#allocation5], 4
      %s28 = int_to_ptr.vmem [resolvable:$true] %s27
      %33 = dma.hbm_to_vmem [thread:$0]  %s1, 256, %s28, [#allocation6], 128, 128, 8
    $region9: #{tpu_custom_call.1} parent=1 // pred_fallthru
      _
    // Predicated region
    $region10: #{tpu_custom_call.1} parent=1 // pred_check
      _
    $region11: #{tpu_custom_call.1} parent=1 // pred_check_branch
      %35 = sbr.rel (0) target = $region13
    $region12: #{tpu_custom_call.1} parent=1 // pred_region
      %36 = dma.done [#allocation3], 256
    $region13: #{tpu_custom_call.1} parent=1 // pred_fallthru
      _
    // Predicated region
    $region14: #{tpu_custom_call.1} parent=1 // pred_check
      _
    $region15: #{tpu_custom_call.1} parent=1 // pred_check_branch
      %38 = sbr.rel (0) target = $region17
    $region16: #{tpu_custom_call.1} parent=1 // pred_region
      %39 = dma.done [#allocation6], 256
    $region17: #{tpu_custom_call.1} parent=1 // pred_fallthru
      _
    %v40 = vld [vmem:[#allocation2] sm:$0xff]
    %v41 = vld [vmem:[#allocation2 + $0x8] sm:$0xff]
    %v42 = vld [vmem:[#allocation5] sm:$0xff]
    %v43 = vld [vmem:[#allocation5 + $0x8] sm:$0xff]
    %v44 = vsub.f32 %v40, %v42
    %v45 = vsub.f32 %v41, %v43
    %v46 = vmul.f32 %v44, %v44
    %v47 = vmul.f32 %v45, %v45
    %v48 = vadd.f32 %v46, 1e-06
    %v49 = vadd.f32 %v47, 1e-06
    %v50 = vrsqrt.pop %v48
    %v51 = vmul.f32 %v48, %v50
    %vm52 = vcmp.eq.f32.partialorder %v48, inf
    %v53 = vsel %vm52, %v48, %v51
    %vm54 = vcmp.eq.f32.partialorder %v48, 0.0
    %v55 = vand.u32 %v48, 2147483648
    %v56 = vsel %vm54, %v55, %v53
    %v57 = vrsqrt.pop %v49
    %v58 = vmul.f32 %v49, %v57
    %vm59 = vcmp.eq.f32.partialorder %v49, inf
    %v60 = vsel %vm59, %v49, %v58
    %vm61 = vcmp.eq.f32.partialorder %v49, 0.0
    %v62 = vand.u32 %v49, 2147483648
    %v63 = vsel %vm61, %v62, %v60
    %v64 = vadd.f32 %v56, %v63
    %65 = vst [vmem:[#allocation7] sm:$0xff] %v64
    // Predicated region
    $region18: #{tpu_custom_call.1} parent=1 // pred_check
      _
    $region19: #{tpu_custom_call.1} parent=1 // pred_check_branch
      %67 = sbr.rel (0) target = $region21
    $region20: #{tpu_custom_call.1} parent=1 // pred_region
      %s69 = ssub.s32 128, 128
      %70 = vsyncadd [#allocation4], %s69
      %s72 = sshll.u32 [#allocation7], 4
      %s73 = int_to_ptr.vmem [resolvable:$true] %s72
      %75 = dma.vmem_to_hbm [thread:$0]  %s73, 128, %s2, [#allocation4]
    $region21: #{tpu_custom_call.1} parent=1 // pred_fallthru
      _
    // Predicated region
    $region22: #{tpu_custom_call.1} parent=1 // pred_check
      _
    $region23: #{tpu_custom_call.1} parent=1 // pred_check_branch
      %77 = sbr.rel (0) target = $region25
    $region24: #{tpu_custom_call.1} parent=1 // pred_region
      %78 = dma.done [#allocation4], 128
    $region25: #{tpu_custom_call.1} parent=1 // pred_fallthru
      _
    %79 = vsyncpa [#allocation3], 1
    %80 = vsyncpa [#allocation6], 1
    %81 = vsyncpa [#allocation4], 1

</llo_original>
